<compile_context>
chip_gen: v5e
topology: v5e:2x2
jax: 0.10.0
libtpu: 0.0.40
codegen_flags: <defaults>
</compile_context>

<pallas_src>
import functools

import jax
import jax.numpy as jnp
from jax.experimental import pallas as pl
from jax.experimental.pallas import tpu as pltpu

_LANE = 128
_SUBLANE = 8


def _bce_blur_kernel(pred_ref, true_ref, out_ref, *,
                     inv_alpha, tm, chunk, grid, rows_last, sub):
    """One grid step: blurred BCE over a (tm, 128) block -> (8, 128) partials."""
    i = pl.program_id(0)

    def _load(ref, start, nrows):
        v = ref[pl.ds(start, nrows), :]
        if v.dtype != jnp.float32:
            v = v.astype(jnp.float32)
        return v

    def _loss(x, y):
        # Stable BCE-with-logits; one exp(-|x|) shared with the sigmoid.
        e = jnp.exp(-jnp.abs(x))
        bce = jnp.maximum(x, 0.0) - x * y + jnp.log1p(e)
        d = 1.0 + e
        r = pl.reciprocal(d, approx=True)
        r = r * (2.0 - d * r)                 # one Newton step (keep: accuracy)
        p = jnp.where(x >= 0.0, r, 1.0 - r)   # sigmoid(x), no extra multiply
        af = 1.0 - jnp.exp((p - y - 1.0) * inv_alpha)
        return bce * af

    def _fold(vals, nrows):
        # (nrows, 128) -> (8, 128): whole-vreg VPU adds only; the single
        # cross-lane reduce happens once, outside the kernel.
        return jnp.sum(vals.reshape(nrows // _SUBLANE, _SUBLANE, _LANE), axis=0)

    def _chunk_body(c, acc):
        start = pl.multiple_of(c * chunk, chunk)
        vals = _loss(_load(pred_ref, start, chunk), _load(true_ref, start, chunk))
        return acc + _fold(vals, chunk)

    zero = jnp.zeros((_SUBLANE, _LANE), jnp.float32)
    n_chunks = tm // chunk
    ragged = rows_last != tm

    def _full_block():
        out_ref[...] = jax.lax.fori_loop(0, n_chunks, _chunk_body, zero)

    def _last_block():
        # Only chunks overlapping valid rows are touched; the single partial
        # chunk is masked with a select (never a multiply: out-of-range rows of
        # an edge block may hold NaN/Inf garbage).
        full = rows_last // chunk
        rem = rows_last - full * chunk
        acc = jax.lax.fori_loop(0, full, _chunk_body, zero) if full else zero
        if rem:
            start = full * chunk                       # Python int
            rem_pad = ((rem + sub - 1) // sub) * sub   # <= chunk, so in-bounds
            vals = _loss(_load(pred_ref, start, rem_pad),
                         _load(true_ref, start, rem_pad))
            row = jax.lax.broadcasted_iota(jnp.int32, (rem_pad, _LANE), 0)
            vals = jnp.where(row < rem, vals, 0.0)
            acc = acc + _fold(vals, rem_pad)
        out_ref[...] = acc

    if not ragged:
        _full_block()
    elif grid == 1:
        _last_block()
    else:
        pl.when(i < grid - 1)(_full_block)
        pl.when(i == grid - 1)(_last_block)


def _bce_blur_elementwise_f32(x, y, inv_alpha):
    loss = jnp.maximum(x, 0.0) - x * y + jnp.log1p(jnp.exp(-jnp.abs(x)))
    p = jax.nn.sigmoid(x)
    return loss * (1.0 - jnp.exp((p - y - 1.0) * inv_alpha))


def bce_blur_with_logits_loss(pred, true, alpha=0.05, *,
                              chunk_rows=256, input_block_budget_bytes=8 << 20):
    assert pred.shape == true.shape
    n = pred.size
    assert n > 0
    inv_alpha = float(1.0 / (alpha + 1e-4))

    p_flat = pred.reshape(-1)   # contiguous reshape: free (no HBM copy)
    t_flat = true.reshape(-1)
    rows = n // _LANE

    # Sublane granularity accounting for sub-32-bit packing of either input.
    def _gran(dt):
        return _SUBLANE * max(1, 4 // jnp.dtype(dt).itemsize)
    sub = max(_gran(pred.dtype), _gran(true.dtype))

    total = jnp.float32(0.0)
    n_main = 0

    if rows >= sub:
        n_main = rows * _LANE
        if n_main != n:
            # TODO(synk): XLA cannot alias a slice into a custom-call operand, so
            # ragged sizes still pay one copy of the main slab; a manual-DMA
            # (pl.ANY) variant would remove it if this shows up on profiles.
            p2 = p_flat[:n_main].reshape(rows, _LANE)
            t2 = t_flat[:n_main].reshape(rows, _LANE)
        else:
            p2 = p_flat.reshape(rows, _LANE)
            t2 = t_flat.reshape(rows, _LANE)

        # Block rows: large enough to amortise the ~0.35us/step pipeline overhead
        # against the HBM roofline, small enough that 2 inputs x 2 pipeline
        # buffers (+ chunked temporaries) stay well inside v7x's 64 MiB/TC VMEM
        # and under the 32 MiB scoped limit requested below.
        # f32+f32 -> tm_cap = 8192 (4 MiB/input/buffer); bf16+bf16 -> 16384.
        bytes_per_row = _LANE * (jnp.dtype(pred.dtype).itemsize
                                 + jnp.dtype(true.dtype).itemsize)
        tm_cap = max(chunk_rows, (input_block_budget_bytes // bytes_per_row)
                     // chunk_rows * chunk_rows)
        tm = min(tm_cap, (rows // sub) * sub)   # multiple of sub, never > rows

        # chunk must divide tm (the in-kernel loop slices [c*chunk, (c+1)*chunk)).
        chunk = min(chunk_rows, tm)
        chunk = (chunk // sub) * sub
        while tm % chunk:
            chunk -= sub

        grid = pl.cdiv(rows, tm)
        rows_last = rows - (grid - 1) * tm

        kernel = functools.partial(
            _bce_blur_kernel,
            inv_alpha=inv_alpha, tm=tm, chunk=chunk,
            grid=grid, rows_last=rows_last, sub=sub,
        )

        cost = pl.CostEstimate(
            flops=16 * n_main,
            transcendentals=3 * n_main,
            bytes_accessed=rows * bytes_per_row + grid * _SUBLANE * _LANE * 4,
        )

        partials = pl.pallas_call(
            kernel,
            out_shape=jax.ShapeDtypeStruct((grid * _SUBLANE, _LANE), jnp.float32),
            grid_spec=pltpu.PrefetchScalarGridSpec(
                num_scalar_prefetch=0,
                grid=(grid,),
                in_specs=[
                    pl.BlockSpec((tm, _LANE), lambda i: (i, 0)),
                    pl.BlockSpec((tm, _LANE), lambda i: (i, 0)),
                ],
                out_specs=pl.BlockSpec((_SUBLANE, _LANE), lambda i: (i, 0)),
            ),
            compiler_params=pltpu.CompilerParams(
                # No carried state across the grid -> parallel.  On v7x, if xprof
                # shows a single active TensorCore, switch to pltpu.CORE_PARALLEL.
                dimension_semantics=("parallel",),
                # v5e's default scoped VMEM is 16 MiB; we need ~18 MiB for the
                # large tiles.  32 MiB is the v6e/v7x default and well under the
                # v7x 64 MiB physical budget.
                vmem_limit_bytes=32 << 20,
            ),
            cost_estimate=cost,
        )(p2, t2)

        total = jnp.sum(partials)

    if n_main != n:
        # Fewer than 8 rows and/or a <128-element lane remainder: tiny, plain JAX
        # (avoids the former jnp.pad full-tensor copy on ragged sizes).
        xr = p_flat[n_main:].astype(jnp.float32)
        yr = t_flat[n_main:].astype(jnp.float32)
        total = total + jnp.sum(_bce_blur_elementwise_f32(xr, yr, inv_alpha))

    return total / jnp.float32(n)


def _reference(pred, true, alpha=0.05):
    x = pred.astype(jnp.float32)
    y = true.astype(jnp.float32)
    loss = jnp.maximum(x, 0.0) - x * y + jnp.log1p(jnp.exp(-jnp.abs(x)))
    p = jax.nn.sigmoid(x)
    af = 1.0 - jnp.exp((p - y - 1.0) / (alpha + 1e-4))
    return jnp.mean(loss * af)


if __name__ == "__main__":
    key = jax.random.PRNGKey(0)
    k1, k2 = jax.random.split(key)
    # Shapes consistent with a detection-head usage: NCHW logits and targets.
    pred = jax.random.normal(k1, (2, 4, 16, 16), dtype=jnp.float32)
    true = (jax.random.uniform(k2, (2, 4, 16, 16)) > 0.5).astype(jnp.float32)

    out = bce_blur_with_logits_loss(pred, true, alpha=0.05)
    out = jax.block_until_ready(out)

    ref = _reference(pred, true, alpha=0.05)
    assert jnp.allclose(out, ref, rtol=1e-4, atol=1e-6), (out, ref)
    print("KERNEL_OK")
</pallas_src>

<mosaic_0001>
module attributes {stable_mosaic.version = 11 : i64} {
  func.func @_bce_blur_kernel(%arg0: i32, %arg1: memref<16x128xf32, #tpu.memory_space<vmem>>, %arg2: memref<16x128xf32, #tpu.memory_space<vmem>>, %arg3: memref<8x128xf32, #tpu.memory_space<vmem>>) attributes {dimension_semantics = [#tpu.dimension_semantics<parallel>], iteration_bounds = array<i64: 1>, scalar_prefetch = 0 : i64, scratch_operands = 0 : i64, tpu.core_type = #tpu.core_type<tc>, window_params = [{transform_indices = @transform_0, window_bounds = array<i64: 16, 128>}, {transform_indices = @transform_1, window_bounds = array<i64: 16, 128>}, {transform_indices = @transform_2, window_bounds = array<i64: 8, 128>}]} {
    %cst = arith.constant 0.000000e+00 : f32
    %0 = vector.broadcast %cst : f32 to vector<8x128xf32>
    %c0_i32 = arith.constant 0 : i32
    %c16_i32 = arith.constant 16 : i32
    %1 = arith.muli %c0_i32, %c16_i32 : i32
    %2 = tpu.assume_multiple %1, 16 : i32
    %3 = arith.index_cast %2 : i32 to index
    %c0 = arith.constant 0 : index
    %4 = vector.load %arg1[%3, %c0] : memref<16x128xf32, #tpu.memory_space<vmem>>, vector<16x128xf32>
    %5 = arith.index_cast %2 : i32 to index
    %c0_0 = arith.constant 0 : index
    %6 = vector.load %arg2[%5, %c0_0] : memref<16x128xf32, #tpu.memory_space<vmem>>, vector<16x128xf32>
    %7 = math.absf %4 : vector<16x128xf32>
    %cst_1 = arith.constant 0.000000e+00 : f32
    %8 = vector.broadcast %cst_1 : f32 to vector<16x128xf32>
    %9 = arith.subf %8, %7 : vector<16x128xf32>
    %10 = math.exp %9 : vector<16x128xf32>
    %cst_2 = arith.constant 0.000000e+00 : f32
    %11 = vector.broadcast %cst_2 : f32 to vector<16x128xf32>
    %12 = arith.maximumf %4, %11 : vector<16x128xf32>
    %13 = arith.mulf %4, %6 : vector<16x128xf32>
    %14 = arith.subf %12, %13 : vector<16x128xf32>
    %15 = math.log1p %10 : vector<16x128xf32>
    %16 = arith.addf %14, %15 : vector<16x128xf32>
    %cst_3 = arith.constant 1.000000e+00 : f32
    %17 = vector.broadcast %cst_3 : f32 to vector<16x128xf32>
    %18 = arith.addf %17, %10 : vector<16x128xf32>
    %19 = tpu.reciprocal %18 {approx = true} : vector<16x128xf32> -> vector<16x128xf32>
    %20 = arith.mulf %18, %19 : vector<16x128xf32>
    %cst_4 = arith.constant 2.000000e+00 : f32
    %21 = vector.broadcast %cst_4 : f32 to vector<16x128xf32>
    %22 = arith.subf %21, %20 : vector<16x128xf32>
    %23 = arith.mulf %19, %22 : vector<16x128xf32>
    %cst_5 = arith.constant 0.000000e+00 : f32
    %24 = vector.broadcast %cst_5 : f32 to vector<16x128xf32>
    %25 = arith.cmpf oge, %4, %24 : vector<16x128xf32>
    %cst_6 = arith.constant 1.000000e+00 : f32
    %26 = vector.broadcast %cst_6 : f32 to vector<16x128xf32>
    %27 = arith.subf %26, %23 : vector<16x128xf32>
    %28 = arith.select %25, %23, %27 : vector<16x128xi1>, vector<16x128xf32>
    %29 = arith.subf %28, %6 : vector<16x128xf32>
    %cst_7 = arith.constant 1.000000e+00 : f32
    %30 = vector.broadcast %cst_7 : f32 to vector<16x128xf32>
    %31 = arith.subf %29, %30 : vector<16x128xf32>
    %cst_8 = arith.constant 19.9600792 : f32
    %32 = vector.broadcast %cst_8 : f32 to vector<16x128xf32>
    %33 = arith.mulf %31, %32 : vector<16x128xf32>
    %34 = math.exp %33 : vector<16x128xf32>
    %cst_9 = arith.constant 1.000000e+00 : f32
    %35 = vector.broadcast %cst_9 : f32 to vector<16x128xf32>
    %36 = arith.subf %35, %34 : vector<16x128xf32>
    %37 = arith.mulf %16, %36 : vector<16x128xf32>
    %38 = vector.shape_cast %37 : vector<16x128xf32> to vector<2x8x128xf32>
    %cst_10 = arith.constant dense<0.000000e+00> : vector<8x128xf32>
    %39 = vector.multi_reduction <add>, %38, %cst_10 [0] : vector<2x8x128xf32> to vector<8x128xf32>
    %40 = arith.addf %0, %39 : vector<8x128xf32>
    %c1_i32 = arith.constant 1 : i32
    %c0_11 = arith.constant 0 : index
    %c0_12 = arith.constant 0 : index
    %41 = vector.load %arg3[%c0_11, %c0_12] : memref<8x128xf32, #tpu.memory_space<vmem>>, vector<8x128xf32>
    tpu.vector_store %arg3[%c0_11, %c0_12], %40 {strides = array<i32>} : memref<8x128xf32, #tpu.memory_space<vmem>>, vector<8x128xf32>,
    return
  }
  func.func @transform_0(%arg0: i32) -> (i32, i32) {
    %c0_i32 = arith.constant 0 : i32
    %c0_i32_0 = arith.constant 0 : i32
    return %arg0, %c0_i32 : i32, i32
  }
  func.func @transform_1(%arg0: i32) -> (i32, i32) {
    %c0_i32 = arith.constant 0 : i32
    %c0_i32_0 = arith.constant 0 : i32
    return %arg0, %c0_i32 : i32, i32
  }
  func.func @transform_2(%arg0: i32) -> (i32, i32) {
    %c0_i32 = arith.constant 0 : i32
    %c0_i32_0 = arith.constant 0 : i32
    return %arg0, %c0_i32 : i32, i32
  }
}

</mosaic_0001>

<llo_original>
// kernel: tpu_custom_call.1
$region0: #{tpu_custom_call.1}
  #allocation0 [shape = 'u32[]', space=smem, size = 0x4, offset = 0x4, fixed_abs, tag = 'smem constant byte address 0x4 - core index']
  #allocation1 [shape = 'u32[72,128]{1,0:T(1,128)}', space=vmem, size = 0x9000, scoped, tag = 'internal scratch']
  %s0 = inlined_call_operand.hbm [shape: f32[16,128], index: 0, kind: input, shape index: {}]
  %s1 = inlined_call_operand.hbm [shape: f32[16,128], index: 1, kind: input, shape index: {}]
  %s2 = inlined_call_operand.hbm [shape: f32[8,128], index: 2, kind: output, shape index: {}]
  %s3 = sld [smem:[#allocation0]]
  $region26: #{tpu_custom_call.1} parent=0
    _
  %s5 = ssub.s32 1, %s3
  %s6 = scalar_select 0, %s5, %s3
  $region1: #{tpu_custom_call.1} parent=0
    #allocation2 [shape = 'u8[8192]{0}', space=vmem, size = 0x2000, scoped, tag = 'input window, operand 0, single buffered']
    #allocation3 [shape = 's32[1]{0}', space=sflag, size = 0x4, scoped, tag = 'scoped memory for tpu_custom_call.1']
    #allocation4 [shape = 's32[1]{0}', space=sflag, size = 0x4, scoped, tag = 'scoped memory for tpu_custom_call.1']
    #allocation5 [shape = 'u8[8192]{0}', space=vmem, size = 0x2000, scoped, tag = 'input window, operand 1, single buffered']
    #allocation6 [shape = 's32[1]{0}', space=sflag, size = 0x4, scoped, tag = 'scoped memory for tpu_custom_call.1']
    #allocation7 [shape = 'u8[4096]{0}', space=vmem, size = 0x1000, scoped, tag = 'output window, operand 0, single buffered']
    %7 = vsyncpa [#allocation3], 0
    %8 = vsyncpa [#allocation6], 0
    %9 = vsyncpa [#allocation4], 0
    // Predicated region
    $region2: #{tpu_custom_call.1} parent=1 // pred_check
      _
    $region3: #{tpu_custom_call.1} parent=1 // pred_check_branch
      %11 = sbr.rel (0) target = $region5
    $region4: #{tpu_custom_call.1} parent=1 // pred_region
      %13 = vsyncadd [#allocation3], 0
      %s14 = sshll.u32 %s0, 4
      %s15 = int_to_ptr.hbm [resolvable:$true] %s14
      %s16 = sshll.u32 [#allocation2], 4
      %s17 = int_to_ptr.vmem [resolvable:$true] %s16
      %22 = dma.hbm_to_vmem [thread:$0]  %s15, 256, %s17, [#allocation3], 128, 128, 8
    $region5: #{tpu_custom_call.1} parent=1 // pred_fallthru
      _
    // Predicated region
    $region6: #{tpu_custom_call.1} parent=1 // pred_check
      _
    $region7: #{tpu_custom_call.1} parent=1 // pred_check_branch
      %24 = sbr.rel (0) target = $region9
    $region8: #{tpu_custom_call.1} parent=1 // pred_region
      %26 = vsyncadd [#allocation6], 0
      %s27 = sshll.u32 %s1, 4
      %s28 = int_to_ptr.hbm [resolvable:$true] %s27
      %s29 = sshll.u32 [#allocation5], 4
      %s30 = int_to_ptr.vmem [resolvable:$true] %s29
      %35 = dma.hbm_to_vmem [thread:$0]  %s28, 256, %s30, [#allocation6], 128, 128, 8
    $region9: #{tpu_custom_call.1} parent=1 // pred_fallthru
      _
    // Predicated region
    $region10: #{tpu_custom_call.1} parent=1 // pred_check
      _
    $region11: #{tpu_custom_call.1} parent=1 // pred_check_branch
      %37 = sbr.rel (0) target = $region13
    $region12: #{tpu_custom_call.1} parent=1 // pred_region
      %39 = dma.done [#allocation3], 256
    $region13: #{tpu_custom_call.1} parent=1 // pred_fallthru
      _
    // Predicated region
    $region14: #{tpu_custom_call.1} parent=1 // pred_check
      _
    $region15: #{tpu_custom_call.1} parent=1 // pred_check_branch
      %41 = sbr.rel (0) target = $region17
    $region16: #{tpu_custom_call.1} parent=1 // pred_region
      %43 = dma.done [#allocation6], 256
    $region17: #{tpu_custom_call.1} parent=1 // pred_fallthru
      _
    %v44 = vld [vmem:[#allocation2] sm:$0xff]
    %v45 = vld [vmem:[#allocation2 + $0x8] sm:$0xff]
    %v46 = vld [vmem:[#allocation5] sm:$0xff]
    %v47 = vld [vmem:[#allocation5 + $0x8] sm:$0xff]
    %v48 = vand.u32 2147483647, %v44
    %v49 = vand.u32 2147483647, %v45
    %v50 = vsub.f32 0.0, %v48
    %v51 = vsub.f32 0.0, %v49
    %v52 = vmul.f32 %v50, 1.442695
    %v53 = vpow.pop %v52
    %v54 = vmul.f32 %v51, 1.442695
    %v55 = vpow.pop %v54
    %v56 = vmax.f32 %v44, 0.0
    %v57 = vmax.f32 %v45, 0.0
    %v58 = vmul.f32 %v44, %v46
    %v59 = vmul.f32 %v45, %v47
    %v60 = vsub.f32 %v56, %v58
    %v61 = vsub.f32 %v57, %v59
    %v62 = vadd.f32 %v53, 1.0
    %v63 = vlog2.pop %v62
    %v64 = vmul.f32 %v63, 0.6931472
    %v65 = vmul.f32 -0.5, %v53
    %v66 = vadd.f32 %v65, 1.0
    %v67 = vmul.f32 %v66, %v53
    %v68 = vand.u32 2147483647, %v53
    %vm69 = vcmp.lt.f32.partialorder %v68, 0.0004427343
    %v70 = vsel %vm69, %v67, %v64
    %v71 = vadd.f32 %v55, 1.0
    %v72 = vlog2.pop %v71
    %v73 = vmul.f32 %v72, 0.6931472
    %v74 = vmul.f32 -0.5, %v55
    %v75 = vadd.f32 %v74, 1.0
    %v76 = vmul.f32 %v75, %v55
    %v77 = vand.u32 2147483647, %v55
    %vm78 = vcmp.lt.f32.partialorder %v77, 0.0004427343
    %v79 = vsel %vm78, %v76, %v73
    %v80 = vadd.f32 %v60, %v70
    %v81 = vadd.f32 %v61, %v79
    %v82 = vadd.f32 %v53, 1.0
    %v83 = vadd.f32 %v55, 1.0
    %v84 = vrcp.pop %v82
    %v85 = vrcp.pop %v83
    %v86 = vmul.f32 %v82, %v84
    %v87 = vmul.f32 %v83, %v85
    %v88 = vsub.f32 2.0, %v86
    %v89 = vsub.f32 2.0, %v87
    %v90 = vmul.f32 %v84, %v88
    %v91 = vmul.f32 %v85, %v89
    %vm92 = vcmp.ge.f32.partialorder %v44, 0.0
    %vm93 = vcmp.ge.f32.partialorder %v45, 0.0
    %v94 = vsub.f32 1.0, %v90
    %v95 = vsub.f32 1.0, %v91
    %v96 = vsel %vm92, %v90, %v94
    %v97 = vsel %vm93, %v91, %v95
    %v98 = vsub.f32 %v96, %v46
    %v99 = vsub.f32 %v97, %v47
    %v100 = vsub.f32 %v98, 1.0
    %v101 = vsub.f32 %v99, 1.0
    %v102 = vmul.f32 %v100, 19.96008
    %v103 = vmul.f32 %v101, 19.96008
    %v104 = vmul.f32 %v102, 1.442695
    %v105 = vpow.pop %v104
    %v106 = vmul.f32 %v103, 1.442695
    %v107 = vpow.pop %v106
    %v108 = vsub.f32 1.0, %v105
    %v109 = vsub.f32 1.0, %v107
    %v110 = vmul.f32 %v80, %v108
    %v111 = vmul.f32 %v81, %v109
    %v112 = vadd.f32 %v110, %v111
    %v113 = vadd.f32 %v112, 0.0
    %114 = vst [vmem:[#allocation7] sm:$0xff] %v113
    // Predicated region
    $region18: #{tpu_custom_call.1} parent=1 // pred_check
      _
    $region19: #{tpu_custom_call.1} parent=1 // pred_check_branch
      %116 = sbr.rel (0) target = $region21
    $region20: #{tpu_custom_call.1} parent=1 // pred_region
      %118 = vsyncadd [#allocation4], 0
      %s120 = sshll.u32 [#allocation7], 4
      %s121 = int_to_ptr.vmem [resolvable:$true] %s120
      %s122 = sshll.u32 %s2, 4
      %s123 = int_to_ptr.hbm [resolvable:$true] %s122
      %125 = dma.vmem_to_hbm [thread:$0]  %s121, 128, %s123, [#allocation4]
    $region21: #{tpu_custom_call.1} parent=1 // pred_fallthru
      _
    // Predicated region
    $region22: #{tpu_custom_call.1} parent=1 // pred_check
      _
    $region23: #{tpu_custom_call.1} parent=1 // pred_check_branch
      %127 = sbr.rel (0) target = $region25
    $region24: #{tpu_custom_call.1} parent=1 // pred_region
      %129 = dma.done [#allocation4], 128
    $region25: #{tpu_custom_call.1} parent=1 // pred_fallthru
      _
    %130 = vsyncpa [#allocation3], 1
    %131 = vsyncpa [#allocation6], 1
    %132 = vsyncpa [#allocation4], 1

</llo_original>
